<compile_context>
chip_gen: v5e
topology: v5e:2x2
jax: 0.10.0
libtpu: 0.0.40
codegen_flags: <defaults>
</compile_context>

<pallas_src>
import jax
import jax.numpy as jnp
from jax.experimental import pallas as pl
from jax.experimental.pallas import tpu as pltpu

# ----------------------------- model hyper-parameters -----------------------------
DIM = 32                              # feature dim fed to the head
NUM_CLASSES = 4
NUM_BOXES = 3
OUT_DIM = NUM_BOXES * (NUM_CLASSES + 4)   # 3 * 8 = 24
BATCH = 2


# ----------------------------------- kernel ---------------------------------------
def _detection_head_kernel(x_ref, w_ref, b_ref, o_ref):
    """Fused forward: o = x @ W + b, batch folded into the MXU M dimension."""
    x = x_ref[...]                                        # (B, DIM)
    w = w_ref[...]                                        # (DIM, OUT_DIM)
    out = jnp.dot(x, w, preferred_element_type=jnp.float32) + b_ref[...]
    o_ref[...] = out.astype(o_ref.dtype)                  # single (B, OUT_DIM) store


# ----------------------------------- wrapper ---------------------------------------
def detection_head(x, w, b):
    """x: (B, DIM) float32; w: (DIM, OUT_DIM); b: (1, OUT_DIM).

    Returns (B, NUM_BOXES, NUM_CLASSES + 4), matching
    nn.Linear(dim, num_boxes*(num_classes+4)) + view.
    """
    batch = x.shape[0]
    vmem = pl.BlockSpec(memory_space=pltpu.MemorySpace.VMEM)   # full-extent VMEM block
    out = pl.pallas_call(
        _detection_head_kernel,
        out_shape=jax.ShapeDtypeStruct((batch, OUT_DIM), jnp.float32),
        in_specs=[vmem, vmem, vmem],
        out_specs=vmem,
    )(x, w, b)
    # The view/reshape is pure metadata; keep it wrapper-side (no extra kernel).
    return out.reshape(batch, NUM_BOXES, NUM_CLASSES + 4)


# ------------------------------------- main ----------------------------------------
if __name__ == "__main__":
    key = jax.random.PRNGKey(0)
    kx, kw, kb = jax.random.split(key, 3)

    # Deterministic small inputs consistent with the module's forward:
    # x is (batch, dim); fc weight is stored pre-transposed as (dim, out_dim)
    # (same math as torch's x @ W.T + b), bias is (1, out_dim).
    x = jax.random.normal(kx, (BATCH, DIM), dtype=jnp.float32)
    bound = 1.0 / (DIM ** 0.5)                           # nn.Linear default init range
    w = jax.random.uniform(kw, (DIM, OUT_DIM), jnp.float32, -bound, bound)
    b = jax.random.uniform(kb, (1, OUT_DIM), jnp.float32, -bound, bound)

    out = jax.jit(detection_head)(x, w, b)
    out = jax.block_until_ready(out)

    # Pure-JAX reference (identical semantics to the PyTorch module in eval mode).
    ref = (x @ w + b).reshape(BATCH, NUM_BOXES, NUM_CLASSES + 4)

    assert out.shape == (BATCH, NUM_BOXES, NUM_CLASSES + 4), out.shape
    assert bool(jnp.all(jnp.isfinite(out)))
    assert bool(jnp.allclose(out, ref, atol=1e-5, rtol=1e-5))
    print("KERNEL_OK")
</pallas_src>

<mosaic_0001>
module attributes {stable_mosaic.version = 11 : i64} {
  func.func @_detection_head_kernel(%arg0: memref<2x32xf32, #tpu.memory_space<vmem>>, %arg1: memref<32x24xf32, #tpu.memory_space<vmem>>, %arg2: memref<1x24xf32, #tpu.memory_space<vmem>>, %arg3: memref<2x24xf32, #tpu.memory_space<vmem>>) attributes {dimension_semantics = [], scalar_prefetch = 0 : i64, scratch_operands = 0 : i64, tpu.core_type = #tpu.core_type<tc>} {
    %c0 = arith.constant 0 : index
    %c0_0 = arith.constant 0 : index
    %0 = vector.load %arg0[%c0, %c0_0] : memref<2x32xf32, #tpu.memory_space<vmem>>, vector<2x32xf32>
    %c0_1 = arith.constant 0 : index
    %c0_2 = arith.constant 0 : index
    %1 = vector.load %arg1[%c0_1, %c0_2] : memref<32x24xf32, #tpu.memory_space<vmem>>, vector<32x24xf32>
    %cst = arith.constant dense<0.000000e+00> : vector<2x24xf32>
    %2 = tpu.matmul %0, %1, %cst {dimension_numbers = #tpu.dot_dimension_numbers<[1], [0], [0], [1], [0, 0, 1, 1], [], []>} : vector<2x32xf32>, vector<32x24xf32>, vector<2x24xf32> -> vector<2x24xf32>
    %c0_3 = arith.constant 0 : index
    %c0_4 = arith.constant 0 : index
    %3 = vector.load %arg2[%c0_3, %c0_4] : memref<1x24xf32, #tpu.memory_space<vmem>>, vector<1x24xf32>
    %4 = vector.broadcast %3 : vector<1x24xf32> to vector<2x24xf32>
    %5 = arith.addf %2, %4 : vector<2x24xf32>
    %c0_5 = arith.constant 0 : index
    %c0_6 = arith.constant 0 : index
    %6 = vector.load %arg3[%c0_5, %c0_6] : memref<2x24xf32, #tpu.memory_space<vmem>>, vector<2x24xf32>
    tpu.vector_store %arg3[%c0_5, %c0_6], %5 {strides = array<i32>} : memref<2x24xf32, #tpu.memory_space<vmem>>, vector<2x24xf32>,
    return
  }
}

</mosaic_0001>

<llo_original>
// kernel: detection_head.1
$region0: #{detection_head.1}
  #allocation0 [shape = 'u32[]', space=smem, size = 0x4, offset = 0x4, fixed_abs, tag = 'smem constant byte address 0x4 - core index']
  #allocation1 [shape = 'u32[72,128]{1,0:T(1,128)}', space=vmem, size = 0x9000, scoped, tag = 'internal scratch']
  %s0 = inlined_call_operand.vmem [shape: f32[2,32], index: 0, kind: input, shape index: {}]
  %s1 = inlined_call_operand.vmem [shape: f32[32,24], index: 1, kind: input, shape index: {}]
  %s2 = inlined_call_operand.vmem [shape: f32[1,24], index: 2, kind: input, shape index: {}]
  %s3 = inlined_call_operand.vmem [shape: f32[2,24], index: 3, kind: output, shape index: {}]
  %s4 = sld [smem:[#allocation0]]
  $region22: #{detection_head.1} parent=0
    _
  %s6 = ssub.s32 1, %s4
  %s7 = scalar_select 0, %s6, %s4
  // Predicated region
  $region2: #{detection_head.1} parent=0 // pred_check
    _
  $region3: #{detection_head.1} parent=0 // pred_check_branch
    %9 = sbr.rel (0) target = $region5
  $region4: #{detection_head.1} parent=0 // pred_region
    _
  $region5: #{detection_head.1} parent=0 // pred_fallthru
    _
  // Predicated region
  $region6: #{detection_head.1} parent=0 // pred_check
    _
  $region7: #{detection_head.1} parent=0 // pred_check_branch
    %11 = sbr.rel (0) target = $region9
  $region8: #{detection_head.1} parent=0 // pred_region
    _
  $region9: #{detection_head.1} parent=0 // pred_fallthru
    _
  // Predicated region
  $region10: #{detection_head.1} parent=0 // pred_check
    _
  $region11: #{detection_head.1} parent=0 // pred_check_branch
    %13 = sbr.rel (0) target = $region13
  $region12: #{detection_head.1} parent=0 // pred_region
    _
  $region13: #{detection_head.1} parent=0 // pred_fallthru
    _
  %v14 = vld [vmem:[%s0] sm:$0x3]
  %v15 = vld [vmem:[%s1] sm:$0xff]
  %v16 = vld [vmem:[%s1 + $0x8] sm:$0xff]
  %v17 = vld [vmem:[%s1 + $0x10] sm:$0xff]
  %v18 = vld [vmem:[%s1 + $0x18] sm:$0xff]
  %v19 = vld [vmem:[%s2] sm:$0x1]
  %v21 = vperm.slane %v19, 0
  %vm23 = vcmask 261120
  %v25 = vsel %vm23, %v14, 0
  %27 = vmatpush.msra.mxu0 0.0
  %28 = vmatpush.msra.mxu0 0.0
  %29 = vmatpush.msra.mxu0 0.0
  %30 = vmatpush.msra.mxu0 0.0
  %31 = vmatpush.msra.mxu0 0.0
  %32 = vmatpush.msra.mxu0 0.0
  %33 = vmatpush.msra.mxu0 0.0
  %34 = vmatpush.msra.mxu0 0.0
  %35 = vmatpush.msra.mxu0 0.0
  %36 = vmatpush.msra.mxu0 0.0
  %37 = vmatpush.msra.mxu0 0.0
  %38 = vmatpush.msra.mxu0 0.0
  %39 = vmatpush.msra.mxu0 %v18
  %40 = vmatpush.msra.mxu0 %v17
  %41 = vmatpush.msra.mxu0 %v16
  %42 = vmatpush.msra.mxu0 %v15
  %43 = vmatmul.f32.gmra.mxu0 %v25
  %v44 = vpop.f32.mrf.mxu0
  %v45 = vadd.f32 %v21, %v44
  %46 = vdwg.mxu0
  %vm47 = vcmask 189440
  %48 = vst.msk [vmem:[%s3] sm:$0x3] %vm47, %v45
  // Predicated region
  $region14: #{detection_head.1} parent=0 // pred_check
    _
  $region15: #{detection_head.1} parent=0 // pred_check_branch
    %50 = sbr.rel (0) target = $region17
  $region16: #{detection_head.1} parent=0 // pred_region
    _
  $region17: #{detection_head.1} parent=0 // pred_fallthru
    _
  // Predicated region
  $region18: #{detection_head.1} parent=0 // pred_check
    _
  $region19: #{detection_head.1} parent=0 // pred_check_branch
    %52 = sbr.rel (0) target = $region21
  $region20: #{detection_head.1} parent=0 // pred_region
    _
  $region21: #{detection_head.1} parent=0 // pred_fallthru
    _

</llo_original>
